<compile_context>
chip_gen: v7x
topology: tpu7x:2x2x1
jax: 0.10.0
libtpu: 0.0.40
codegen_flags: <defaults>
</compile_context>

<pallas_src>
import functools
import math

import jax
import jax.numpy as jnp
from jax import lax
from jax.experimental import pallas as pl
from jax.experimental.pallas import tpu as pltpu

LN_EPS = 1e-12           # BERT layer_norm_eps
QA_PAD = 128             # qa_outputs padded to 128 classes for lane density (sliced to 32)


# ----------------------------- generation-aware knobs -----------------------------

@functools.lru_cache(maxsize=None)
def _device_kind():
    try:
        return jax.devices()[0].device_kind.lower()
    except Exception:
        return ""


@functools.lru_cache(maxsize=None)
def _target_lane_width():
    """MXU contraction width target for the head-group packing."""
    kind = _device_kind()
    if "v6" in kind or "v7" in kind:
        return 256        # v6e / v7x: 256-wide MXU
    return 128            # v5e and older: 128-wide MXU


@functools.lru_cache(maxsize=None)
def _vmem_limit_bytes():
    kind = _device_kind()
    if "v7" in kind:
        return 48 * 1024 * 1024    # v7x: 64 MiB physical per TC, leave headroom
    return 64 * 1024 * 1024        # v5e / v6e: 128 MiB physical


def _vmem_budget():
    return _vmem_limit_bytes() - (12 << 20)   # margin for compiler-internal scratch


def _mosaic_params(semantics):
    return pltpu.CompilerParams(dimension_semantics=semantics,
                                vmem_limit_bytes=_vmem_limit_bytes())


def _pick_rows(M, cap):
    """Largest row tile that divides M, is a multiple of 8 and <= cap; M itself if it fits."""
    if M <= cap:
        return M
    best = 0
    t = 8
    while t <= cap:
        if M % t == 0:
            best = t
        t += 8
    return best if best > 0 else M


def _pick_cols(N, K, budget):
    """Full N if the [K, N] weight (double-buffered) fits half the budget, else the largest
    128-multiple divisor of N that does."""
    if 4 * K * N <= budget // 2:
        return N
    best = N
    t = 128
    while t < N:
        if N % t == 0 and 4 * K * t <= budget // 2:
            best = t
        t += 128
    return best


def _head_group(n_heads, head_dim, target_lanes):
    """Smallest divisor of n_heads whose packed width hp*dh reaches the MXU width target."""
    for hp in range(1, n_heads + 1):
        if n_heads % hp == 0 and hp * head_dim >= target_lanes:
            return hp
    return n_heads


# ----------------------------- Pallas kernels -----------------------------

def _emb_add_ln_kernel(we_ref, te_ref, pe_ref, g_ref, b_ref, o_ref):
    # fused word + token-type + position embedding add + LayerNorm (one batch per step).
    x = (we_ref[0].astype(jnp.float32) + te_ref[0].astype(jnp.float32)
         + pe_ref[...].astype(jnp.float32))
    mu = jnp.mean(x, axis=-1, keepdims=True)
    var = jnp.mean(jnp.square(x - mu), axis=-1, keepdims=True)
    y = (x - mu) * lax.rsqrt(var + LN_EPS) * g_ref[...].astype(jnp.float32) \
        + b_ref[...].astype(jnp.float32)
    o_ref[0] = y.astype(o_ref.dtype)


def _linear_kernel(x_ref, w_ref, b_ref, o_ref, *, activation):
    # full-K single dot (no reduction grid axis / accumulator); bias (+GELU) fused.
    y = jnp.dot(x_ref[...], w_ref[...], preferred_element_type=jnp.float32)
    y = y + b_ref[...].astype(jnp.float32)
    if activation == "gelu":
        c = 0.7978845608028654  # sqrt(2/pi)  (tanh-approx GELU, see TODO above)
        y = 0.5 * y * (1.0 + jnp.tanh(c * (y + 0.044715 * y * y * y)))
    o_ref[...] = y.astype(o_ref.dtype)


def _linear_add_ln_kernel(x_ref, w_ref, b_ref, r_ref, g_ref, be_ref, o_ref):
    # full-K single dot + bias + residual + LayerNorm epilogue (N un-tiled).
    h = jnp.dot(x_ref[...], w_ref[...], preferred_element_type=jnp.float32)
    h = h + b_ref[...].astype(jnp.float32) + r_ref[...].astype(jnp.float32)
    mu = jnp.mean(h, axis=-1, keepdims=True)
    var = jnp.mean(jnp.square(h - mu), axis=-1, keepdims=True)
    y = (h - mu) * lax.rsqrt(var + LN_EPS) * g_ref[...].astype(jnp.float32) \
        + be_ref[...].astype(jnp.float32)
    o_ref[...] = y.astype(o_ref.dtype)


def _qkv_kernel(x_ref, w_ref, b_ref, o_ref, *, n_col, cb):
    # one batch per step: [S, H] @ [H, 3H] with the full fused weight VMEM-resident;
    # output written directly in head-grouped [3G, S, cb] layout (lane-dense stores).
    y = jnp.dot(x_ref[0], w_ref[...], preferred_element_type=jnp.float32)
    y = y + b_ref[...].astype(jnp.float32)
    for g in range(n_col):
        o_ref[0, g] = y[:, g * cb:(g + 1) * cb].astype(o_ref.dtype)


def _attention_kernel(q_ref, k_ref, v_ref, m_ref, o_ref, *, dh, hp, scale):
    # one (batch, head-group, q-tile): softmax(q k^T * scale + mask) v for hp heads,
    # q tiled along the query axis so the [tq, S] f32 score tile stays bounded.
    mask = m_ref[0, 0].astype(jnp.float32)                       # [1, S]
    outs = []
    for j in range(hp):
        lo = j * dh
        q = q_ref[0, 0, :, lo:lo + dh]                           # [tq, dh] bf16
        kk = k_ref[0, 0, :, lo:lo + dh]                          # [S, dh]
        v = v_ref[0, 0, :, lo:lo + dh]                           # [S, dh]
        s = lax.dot_general(q, kk, (((1,), (1,)), ((), ())),     # q @ k^T without transpose
                            preferred_element_type=jnp.float32)
        s = s * scale + mask
        s = s - jnp.max(s, axis=-1, keepdims=True)
        p = jnp.exp(s)
        p = p * pl.reciprocal(jnp.sum(p, axis=-1, keepdims=True), approx=True)
        outs.append(jnp.dot(p.astype(v.dtype), v, preferred_element_type=jnp.float32))
    o_ref[0, 0] = jnp.concatenate(outs, axis=-1).astype(o_ref.dtype)   # lane-dense store


def _attn_out_add_ln_kernel(ctx_ref, w_ref, b_ref, r_ref, g_ref, be_ref, o_ref, *, ngrp, cb):
    # one batch per step: whole per-batch context consumed at once, full [H, H] weight
    # resident (sublane-aligned per-group row slabs), fused residual-add + LayerNorm.
    acc = jnp.dot(ctx_ref[0, 0], w_ref[0:cb, :], preferred_element_type=jnp.float32)
    for g in range(1, ngrp):
        acc = acc + jnp.dot(ctx_ref[0, g], w_ref[g * cb:(g + 1) * cb, :],
                            preferred_element_type=jnp.float32)
    h = acc + b_ref[...].astype(jnp.float32) + r_ref[0].astype(jnp.float32)
    mu = jnp.mean(h, axis=-1, keepdims=True)
    var = jnp.mean(jnp.square(h - mu), axis=-1, keepdims=True)
    y = (h - mu) * lax.rsqrt(var + LN_EPS) * g_ref[...].astype(jnp.float32) \
        + be_ref[...].astype(jnp.float32)
    o_ref[0] = y.astype(o_ref.dtype)


# ----------------------------- kernel wrappers -----------------------------

def embeddings_ln(we, te, pe, gamma, beta, out_dtype=jnp.bfloat16):
    """LayerNorm(word + token-type + position embeddings), fused add, one batch per step."""
    B, S, H = we.shape
    out = pl.pallas_call(
        _emb_add_ln_kernel,
        grid=(B,),
        in_specs=[pl.BlockSpec((1, S, H), lambda b: (b, 0, 0)),
                  pl.BlockSpec((1, S, H), lambda b: (b, 0, 0)),
                  pl.BlockSpec((S, H), lambda b: (0, 0)),
                  pl.BlockSpec((1, H), lambda b: (0, 0)),
                  pl.BlockSpec((1, H), lambda b: (0, 0))],
        out_specs=pl.BlockSpec((1, S, H), lambda b: (b, 0, 0)),
        out_shape=jax.ShapeDtypeStruct((B, S, H), out_dtype),
        compiler_params=_mosaic_params(("parallel",)),
    )(we, te, pe, gamma, beta)
    return out.reshape(B * S, H)


def linear(x, w, b, activation=None):
    """y = act(x @ w + b); w pre-transposed [in, out]; weight kept VMEM-resident."""
    M, K = x.shape
    N = w.shape[1]
    budget = _vmem_budget()
    tn = _pick_cols(N, K, budget)                      # full N for all BERT shapes
    w_bytes = 4 * K * tn                               # weight (2 pipeline buffers, conservative)
    row_bytes = 4 * K + 8 * tn + 4 * tn                # x dbuf + out dbuf + f32 epilogue temp
    tm = _pick_rows(M, max((budget - w_bytes) // row_bytes, 8))
    return pl.pallas_call(
        functools.partial(_linear_kernel, activation=activation),
        grid=(M // tm, N // tn),
        in_specs=[pl.BlockSpec((tm, K), lambda i, j: (i, 0)),    # x: once per M tile
                  pl.BlockSpec((K, tn), lambda i, j: (0, j)),    # weight: constant when tn == N
                  pl.BlockSpec((1, tn), lambda i, j: (0, j))],
        out_specs=pl.BlockSpec((tm, tn), lambda i, j: (i, j)),
        out_shape=jax.ShapeDtypeStruct((M, N), x.dtype),
        compiler_params=_mosaic_params(("parallel", "parallel")),
    )(x, w, b)


def linear_add_ln(x, w, b, res, gamma, beta):
    """LayerNorm(x @ w + b + res); N un-tiled (needed for LN), weight VMEM-resident."""
    M, K = x.shape
    N = w.shape[1]
    budget = _vmem_budget()
    w_bytes = 4 * K * N
    row_bytes = 4 * K + 12 * N + 4 * N                 # x dbuf + (out+res) dbuf + f32 temps
    tm = _pick_rows(M, max((budget - w_bytes) // row_bytes, 8))
    return pl.pallas_call(
        _linear_add_ln_kernel,
        grid=(M // tm,),
        in_specs=[pl.BlockSpec((tm, K), lambda i: (i, 0)),
                  pl.BlockSpec((K, N), lambda i: (0, 0)),        # weight fetched once
                  pl.BlockSpec((1, N), lambda i: (0, 0)),
                  pl.BlockSpec((tm, N), lambda i: (i, 0)),
                  pl.BlockSpec((1, N), lambda i: (0, 0)),
                  pl.BlockSpec((1, N), lambda i: (0, 0))],
        out_specs=pl.BlockSpec((tm, N), lambda i: (i, 0)),
        out_shape=jax.ShapeDtypeStruct((M, N), x.dtype),
        compiler_params=_mosaic_params(("parallel",)),
    )(x, w, b, res, gamma, beta)


def qkv_projection(x2, w, b, B, S, cb):
    """Fused QKV: [B,S,H] @ [H,3H] + b, emitted head-grouped as [B, 3H//cb, S, cb]."""
    H = x2.shape[1]
    N = w.shape[1]
    n_col = N // cb
    x3 = x2.reshape(B, S, H)
    return pl.pallas_call(
        functools.partial(_qkv_kernel, n_col=n_col, cb=cb),
        grid=(B,),
        in_specs=[pl.BlockSpec((1, S, H), lambda bb: (bb, 0, 0)),
                  pl.BlockSpec((H, N), lambda bb: (0, 0)),       # full fused weight, fetched once
                  pl.BlockSpec((1, N), lambda bb: (0, 0))],
        out_specs=pl.BlockSpec((1, n_col, S, cb), lambda bb: (bb, 0, 0, 0)),
        out_shape=jax.ShapeDtypeStruct((B, n_col, S, cb), x2.dtype),
        compiler_params=_mosaic_params(("parallel",)),
    )(x3, w, b)


def attention(qkv, ext_mask, ngrp, hp, dh):
    """qkv: [B, 3*ngrp, S, cb]; ext_mask: [B,1,1,S] f32 -> ctx [B, ngrp, S, cb]."""
    B, _, S, cb = qkv.shape
    scale = 1.0 / math.sqrt(dh)
    tq = _pick_rows(S, 256)                            # bound the [tq, S] score-tile live range
    return pl.pallas_call(
        functools.partial(_attention_kernel, dh=dh, hp=hp, scale=scale),
        grid=(B, ngrp, S // tq),
        in_specs=[pl.BlockSpec((1, 1, tq, cb), lambda b, g, qi: (b, g, qi, 0)),
                  pl.BlockSpec((1, 1, S, cb), lambda b, g, qi: (b, ngrp + g, 0, 0)),
                  pl.BlockSpec((1, 1, S, cb), lambda b, g, qi: (b, 2 * ngrp + g, 0, 0)),
                  pl.BlockSpec((1, 1, 1, S), lambda b, g, qi: (b, 0, 0, 0))],
        out_specs=pl.BlockSpec((1, 1, tq, cb), lambda b, g, qi: (b, g, qi, 0)),
        out_shape=jax.ShapeDtypeStruct((B, ngrp, S, cb), qkv.dtype),
        compiler_params=_mosaic_params(("parallel", "parallel", "parallel")),
    )(qkv, qkv, qkv, ext_mask)


def attn_out_add_ln(ctx, w, b, res2, gamma, beta, B, S):
    """LayerNorm(ctx @ ao_w + b + res); whole per-batch context + resident [H,H] weight."""
    _, ngrp, _, cb = ctx.shape
    H = w.shape[1]
    res3 = res2.reshape(B, S, H)
    out = pl.pallas_call(
        functools.partial(_attn_out_add_ln_kernel, ngrp=ngrp, cb=cb),
        grid=(B,),
        in_specs=[pl.BlockSpec((1, ngrp, S, cb), lambda bb: (bb, 0, 0, 0)),
                  pl.BlockSpec((H, H), lambda bb: (0, 0)),       # full weight, fetched once
                  pl.BlockSpec((1, H), lambda bb: (0, 0)),
                  pl.BlockSpec((1, S, H), lambda bb: (bb, 0, 0)),
                  pl.BlockSpec((1, H), lambda bb: (0, 0)),
                  pl.BlockSpec((1, H), lambda bb: (0, 0))],
        out_specs=pl.BlockSpec((1, S, H), lambda bb: (bb, 0, 0)),
        out_shape=jax.ShapeDtypeStruct((B, S, H), res2.dtype),
        compiler_params=_mosaic_params(("parallel",)),
    )(ctx, w, b, res3, gamma, beta)
    return out.reshape(B * S, H)


# ----------------------------- BERT model (glue + kernels) -----------------------------

def init_params(key, *, vocab_size, type_vocab_size, max_pos, hidden, heads,
                intermediate, num_layers, num_classes=2, dtype=jnp.bfloat16):
    def nrm(k, shape):
        return (jax.random.normal(k, shape, jnp.float32) * 0.02).astype(dtype)

    keys = iter(jax.random.split(key, 8 + num_layers * 8))
    p = {
        "word_emb": nrm(next(keys), (vocab_size, hidden)),
        "tok_emb": nrm(next(keys), (type_vocab_size, hidden)),
        "pos_emb": nrm(next(keys), (max_pos, hidden)),
        "emb_ln_g": jnp.ones((1, hidden), dtype),
        "emb_ln_b": jnp.zeros((1, hidden), dtype),
        "num_heads": heads,
        "layers": [],
    }
    for _ in range(num_layers):
        layer = {
            # weights stored pre-transposed [in, out]; q|k|v fused along the out axis
            "qkv_w": nrm(next(keys), (hidden, 3 * hidden)),
            "qkv_b": jnp.zeros((1, 3 * hidden), dtype),
            "ao_w": nrm(next(keys), (hidden, hidden)),
            "ao_b": jnp.zeros((1, hidden), dtype),
            "ln1_g": jnp.ones((1, hidden), dtype), "ln1_b": jnp.zeros((1, hidden), dtype),
            "ff1_w": nrm(next(keys), (hidden, intermediate)),
            "ff1_b": jnp.zeros((1, intermediate), dtype),
            "ff2_w": nrm(next(keys), (intermediate, hidden)),
            "ff2_b": jnp.zeros((1, hidden), dtype),
            "ln2_g": jnp.ones((1, hidden), dtype), "ln2_b": jnp.zeros((1, hidden), dtype),
        }
        p["layers"].append(layer)

    # qa_outputs: 2 real classes, zero-padded to 128 for lane density (sliced to 32 like pad_weight).
    qa_w = jax.random.normal(next(keys), (num_classes, hidden), jnp.float32) * 0.02
    p["qa_w"] = jnp.pad(qa_w.T, ((0, 0), (0, QA_PAD - num_classes))).astype(dtype)
    p["qa_b"] = jnp.zeros((1, QA_PAD), dtype)
    return p


def encoder_layer(p, x2, ext_mask, B, S, nH, hp, dh):
    ngrp = nH // hp
    cb = hp * dh
    qkv = qkv_projection(x2, p["qkv_w"], p["qkv_b"], B, S, cb)        # [B, 3*ngrp, S, cb]
    ctx = attention(qkv, ext_mask, ngrp, hp, dh)                      # [B, ngrp, S, cb]
    x2 = attn_out_add_ln(ctx, p["ao_w"], p["ao_b"], x2, p["ln1_g"], p["ln1_b"], B, S)
    h = linear(x2, p["ff1_w"], p["ff1_b"], activation="gelu")
    x2 = linear_add_ln(h, p["ff2_w"], p["ff2_b"], x2, p["ln2_g"], p["ln2_b"])
    return x2


def bert_batch_forward(params, PERF_CNT, input_ids, attention_mask=None, token_type_ids=None):
    """Mirrors TtBertBatchDram.forward: returns a list of PERF_CNT outputs [B, 1, S, 32]."""
    B, S = input_ids.shape
    H = params["word_emb"].shape[1]
    nH = params["num_heads"]
    dh = H // nH
    hp = _head_group(nH, dh, _target_lane_width())
    if token_type_ids is None:
        token_type_ids = jnp.zeros_like(input_ids)

    # embeddings (gather glue in plain JAX, bf16) + fused add + LayerNorm (Pallas)
    we = jnp.take(params["word_emb"], input_ids, axis=0)              # [B, S, H] bf16
    te = jnp.take(params["tok_emb"], token_type_ids, axis=0)          # [B, S, H] bf16
    pe = params["pos_emb"][:S]                                        # [S, H]    bf16
    emb2 = embeddings_ln(we, te, pe, params["emb_ln_g"], params["emb_ln_b"])

    # extended attention mask: (1 - mask) * -100000, kept in f32 (parity with clamp(-100000))
    if attention_mask is not None:
        ext = (1.0 - attention_mask.astype(jnp.float32)) * -100000.0
    else:
        ext = jnp.zeros((B, S), jnp.float32)
    ext = ext[:, None, None, :]                                       # [B, 1, 1, S] f32

    outs = []
    for _ in range(PERF_CNT):
        x2 = emb2
        for layer in params["layers"]:
            x2 = encoder_layer(layer, x2, ext, B, S, nH, hp, dh)
        logits = linear(x2, params["qa_w"], params["qa_b"])           # [B*S, 128] (lane-dense)
        logits = logits[:, :32].reshape(B, 1, S, 32)                  # match ttnn 32-class pad
        outs.append(logits)
    return outs


# ----------------------------- demo -----------------------------

if __name__ == "__main__":
    B, S, H = 2, 8, 32
    HEADS, INTER, LAYERS = 2, 64, 2
    VOCAB, TYPE_VOCAB, MAX_POS = 100, 2, 16

    key = jax.random.PRNGKey(0)
    kp, ki, kt = jax.random.split(key, 3)
    params = init_params(kp, vocab_size=VOCAB, type_vocab_size=TYPE_VOCAB,
                         max_pos=MAX_POS, hidden=H, heads=HEADS,
                         intermediate=INTER, num_layers=LAYERS)

    input_ids = jax.random.randint(ki, (B, S), 0, VOCAB, dtype=jnp.int32)
    token_type_ids = jax.random.randint(kt, (B, S), 0, TYPE_VOCAB, dtype=jnp.int32)
    attention_mask = jnp.ones((B, S), jnp.int32).at[1, S - 2:].set(0)  # mask last 2 toks of batch 1

    tt_out_list = bert_batch_forward(params, 1, input_ids, attention_mask, token_type_ids)
    out = jax.block_until_ready(tt_out_list[0])
    assert out.shape == (B, 1, S, 32) and out.dtype == jnp.bfloat16
    assert bool(jnp.all(jnp.isfinite(out.astype(jnp.float32))))
    print("KERNEL_OK")
</pallas_src>

<mosaic_0001>
module attributes {stable_mosaic.version = 11 : i64} {
  func.func @_emb_add_ln_kernel(%arg0: i32, %arg1: memref<1x8x32xbf16, #tpu.memory_space<vmem>>, %arg2: memref<1x8x32xbf16, #tpu.memory_space<vmem>>, %arg3: memref<8x32xbf16, #tpu.memory_space<vmem>>, %arg4: memref<1x32xbf16, #tpu.memory_space<vmem>>, %arg5: memref<1x32xbf16, #tpu.memory_space<vmem>>, %arg6: memref<1x8x32xbf16, #tpu.memory_space<vmem>>) attributes {dimension_semantics = [#tpu.dimension_semantics<parallel>], iteration_bounds = array<i64: 2>, scalar_prefetch = 0 : i64, scratch_operands = 0 : i64, tpu.core_type = #tpu.core_type<tc>, window_params = [{transform_indices = @transform_0, window_bounds = array<i64: 1, 8, 32>}, {transform_indices = @transform_1, window_bounds = array<i64: 1, 8, 32>}, {pipeline_mode = #tpu.pipeline_mode<synchronous>, transform_indices = @transform_2, window_bounds = array<i64: 8, 32>}, {pipeline_mode = #tpu.pipeline_mode<synchronous>, transform_indices = @transform_3, window_bounds = array<i64: 1, 32>}, {pipeline_mode = #tpu.pipeline_mode<synchronous>, transform_indices = @transform_4, window_bounds = array<i64: 1, 32>}, {transform_indices = @transform_5, window_bounds = array<i64: 1, 8, 32>}]} {
    %c0 = arith.constant 0 : index
    %c0_0 = arith.constant 0 : index
    %c0_1 = arith.constant 0 : index
    %0 = vector.load %arg1[%c0, %c0_0, %c0_1] : memref<1x8x32xbf16, #tpu.memory_space<vmem>>, vector<1x8x32xbf16>
    %1 = vector.shape_cast %0 : vector<1x8x32xbf16> to vector<8x32xbf16>
    %2 = arith.extf %1 : vector<8x32xbf16> to vector<8x32xf32>
    %c0_2 = arith.constant 0 : index
    %c0_3 = arith.constant 0 : index
    %c0_4 = arith.constant 0 : index
    %3 = vector.load %arg2[%c0_2, %c0_3, %c0_4] : memref<1x8x32xbf16, #tpu.memory_space<vmem>>, vector<1x8x32xbf16>
    %4 = vector.shape_cast %3 : vector<1x8x32xbf16> to vector<8x32xbf16>
    %5 = arith.extf %4 : vector<8x32xbf16> to vector<8x32xf32>
    %6 = arith.addf %2, %5 : vector<8x32xf32>
    %c0_5 = arith.constant 0 : index
    %c0_6 = arith.constant 0 : index
    %7 = vector.load %arg3[%c0_5, %c0_6] : memref<8x32xbf16, #tpu.memory_space<vmem>>, vector<8x32xbf16>
    %8 = arith.extf %7 : vector<8x32xbf16> to vector<8x32xf32>
    %9 = arith.addf %6, %8 : vector<8x32xf32>
    %cst = arith.constant dense<0.000000e+00> : vector<8xf32>
    %10 = vector.multi_reduction <add>, %9, %cst [1] : vector<8x32xf32> to vector<8xf32>
    %11 = vector.shape_cast %10 : vector<8xf32> to vector<8x1xf32>
    %cst_7 = arith.constant 3.200000e+01 : f32
    %12 = vector.broadcast %cst_7 : f32 to vector<8x1xf32>
    %13 = arith.divf %11, %12 : vector<8x1xf32>
    %14 = vector.broadcast %13 : vector<8x1xf32> to vector<8x32xf32>
    %15 = arith.subf %9, %14 : vector<8x32xf32>
    %16 = arith.mulf %15, %15 : vector<8x32xf32>
    %cst_8 = arith.constant dense<0.000000e+00> : vector<8xf32>
    %17 = vector.multi_reduction <add>, %16, %cst_8 [1] : vector<8x32xf32> to vector<8xf32>
    %18 = vector.shape_cast %17 : vector<8xf32> to vector<8x1xf32>
    %cst_9 = arith.constant 3.200000e+01 : f32
    %19 = vector.broadcast %cst_9 : f32 to vector<8x1xf32>
    %20 = arith.divf %18, %19 : vector<8x1xf32>
    %21 = vector.broadcast %13 : vector<8x1xf32> to vector<8x32xf32>
    %22 = arith.subf %9, %21 : vector<8x32xf32>
    %cst_10 = arith.constant 9.99999996E-13 : f32
    %23 = vector.broadcast %cst_10 : f32 to vector<8x1xf32>
    %24 = arith.addf %20, %23 : vector<8x1xf32>
    %25 = math.rsqrt %24 : vector<8x1xf32>
    %26 = vector.broadcast %25 : vector<8x1xf32> to vector<8x32xf32>
    %27 = arith.mulf %22, %26 : vector<8x32xf32>
    %c0_11 = arith.constant 0 : index
    %c0_12 = arith.constant 0 : index
    %28 = vector.load %arg4[%c0_11, %c0_12] : memref<1x32xbf16, #tpu.memory_space<vmem>>, vector<1x32xbf16>
    %29 = arith.extf %28 : vector<1x32xbf16> to vector<1x32xf32>
    %30 = vector.broadcast %29 : vector<1x32xf32> to vector<8x32xf32>
    %31 = arith.mulf %27, %30 : vector<8x32xf32>
    %c0_13 = arith.constant 0 : index
    %c0_14 = arith.constant 0 : index
    %32 = vector.load %arg5[%c0_13, %c0_14] : memref<1x32xbf16, #tpu.memory_space<vmem>>, vector<1x32xbf16>
    %33 = arith.extf %32 : vector<1x32xbf16> to vector<1x32xf32>
    %34 = vector.broadcast %33 : vector<1x32xf32> to vector<8x32xf32>
    %35 = arith.addf %31, %34 : vector<8x32xf32>
    %36 = arith.truncf %35 : vector<8x32xf32> to vector<8x32xbf16>
    %c0_15 = arith.constant 0 : index
    %c0_16 = arith.constant 0 : index
    %c0_17 = arith.constant 0 : index
    %37 = vector.load %arg6[%c0_15, %c0_16, %c0_17] : memref<1x8x32xbf16, #tpu.memory_space<vmem>>, vector<1x8x32xbf16>
    %38 = vector.shape_cast %37 : vector<1x8x32xbf16> to vector<8x32xbf16>
    %39 = vector.shape_cast %36 : vector<8x32xbf16> to vector<1x8x32xbf16>
    tpu.vector_store %arg6[%c0_15, %c0_16, %c0_17], %39 {strides = array<i32>} : memref<1x8x32xbf16, #tpu.memory_space<vmem>>, vector<1x8x32xbf16>,
    return
  }
  func.func @transform_0(%arg0: i32) -> (i32, i32, i32) {
    %c0_i32 = arith.constant 0 : i32
    %c0_i32_0 = arith.constant 0 : i32
    %c0_i32_1 = arith.constant 0 : i32
    return %arg0, %c0_i32, %c0_i32_0 : i32, i32, i32
  }
  func.func @transform_1(%arg0: i32) -> (i32, i32, i32) {
    %c0_i32 = arith.constant 0 : i32
    %c0_i32_0 = arith.constant 0 : i32
    %c0_i32_1 = arith.constant 0 : i32
    return %arg0, %c0_i32, %c0_i32_0 : i32, i32, i32
  }
  func.func @transform_2(%arg0: i32) -> (i32, i32) {
    %c0_i32 = arith.constant 0 : i32
    %c0_i32_0 = arith.constant 0 : i32
    %c0_i32_1 = arith.constant 0 : i32
    return %c0_i32, %c0_i32_0 : i32, i32
  }
  func.func @transform_3(%arg0: i32) -> (i32, i32) {
    %c0_i32 = arith.constant 0 : i32
    %c0_i32_0 = arith.constant 0 : i32
    %c0_i32_1 = arith.constant 0 : i32
    return %c0_i32, %c0_i32_0 : i32, i32
  }
  func.func @transform_4(%arg0: i32) -> (i32, i32) {
    %c0_i32 = arith.constant 0 : i32
    %c0_i32_0 = arith.constant 0 : i32
    %c0_i32_1 = arith.constant 0 : i32
    return %c0_i32, %c0_i32_0 : i32, i32
  }
  func.func @transform_5(%arg0: i32) -> (i32, i32, i32) {
    %c0_i32 = arith.constant 0 : i32
    %c0_i32_0 = arith.constant 0 : i32
    %c0_i32_1 = arith.constant 0 : i32
    return %arg0, %c0_i32, %c0_i32_0 : i32, i32, i32
  }
}

</mosaic_0001>

<llo_original>
// kernel: tpu_custom_call.1
$region0: #{tpu_custom_call.1}
  #allocation0 [shape = 'u32[]', space=smem, size = 0x4, offset = 0x4, fixed_abs, tag = 'smem constant byte address 0x4 - core index']
  #allocation1 [shape = 'u32[144,128]{1,0:T(1,128)}', space=vmem, size = 0x12000, scoped, tag = 'internal scratch']
  %s0 = inlined_call_operand.hbm [shape: bf16[2,8,32], index: 0, kind: input, shape index: {}]
  %s1 = inlined_call_operand.hbm [shape: bf16[2,8,32], index: 1, kind: input, shape index: {}]
  %s2 = inlined_call_operand.hbm [shape: bf16[8,32], index: 2, kind: input, shape index: {}]
  %s3 = inlined_call_operand.hbm [shape: bf16[1,32], index: 3, kind: input, shape index: {}]
  %s4 = inlined_call_operand.hbm [shape: bf16[1,32], index: 4, kind: input, shape index: {}]
  %s5 = inlined_call_operand.hbm [shape: bf16[2,8,32], index: 5, kind: output, shape index: {}]
  %s6 = sld [smem:[#allocation0]]
  $region73: #{tpu_custom_call.1} parent=0
    _
  %s8 = ssub.s32 1, %s6
  %s9 = scalar_select 0, %s8, %s6
  $region1: #{tpu_custom_call.1} parent=0
    #allocation2 [shape = 'u8[4096]{0}', space=vmem, size = 0x1000, scoped, tag = 'input window, operand 0']
    #allocation3 [shape = 's32[2]{0}', space=sflag, size = 0x8, scoped, tag = 'scoped memory for tpu_custom_call.1']
    #allocation4 [shape = 's32[2]{0}', space=sflag, size = 0x8, scoped, tag = 'scoped memory for tpu_custom_call.1']
    #allocation5 [shape = 'u8[4096]{0}', space=vmem, size = 0x1000, scoped, tag = 'input window, operand 1']
    #allocation6 [shape = 's32[2]{0}', space=sflag, size = 0x8, scoped, tag = 'scoped memory for tpu_custom_call.1']
    #allocation7 [shape = 'u8[2048]{0}', space=vmem, size = 0x800, scoped, tag = 'input window, operand 2, single buffered']
    #allocation8 [shape = 'u8[512]{0}', space=vmem, size = 0x400, scoped, tag = 'input window, operand 3, single buffered']
    #allocation9 [shape = 's32[1]{0}', space=sflag, size = 0x4, scoped, tag = 'scoped memory for tpu_custom_call.1']
    #allocation10 [shape = 'u8[512]{0}', space=vmem, size = 0x400, scoped, tag = 'input window, operand 4, single buffered']
    #allocation11 [shape = 'u8[4096]{0}', space=vmem, size = 0x1000, scoped, tag = 'output window, operand 0']
    %10 = vsyncpa [#allocation3], 0
    %s11 = scalar_lea.sflag [#allocation3], 1
    %12 = vsyncpa %s11, 0
    %13 = vsyncpa [#allocation6], 0
    %s14 = scalar_lea.sflag [#allocation6], 1
    %15 = vsyncpa %s14, 0
    %16 = vsyncpa [#allocation9], 0
    %17 = vsyncpa [#allocation4], 0
    %s18 = scalar_lea.sflag [#allocation4], 1
    %19 = vsyncpa %s18, 0
    loop: start=0, step=1, limit=4
    $region2: #{tpu_custom_call.1} parent=1 // loop_pre_header
      _
    $region3: #{tpu_custom_call.1} parent=1 // loop_header
      %s21 = sphi 0, %s25
      %p22 = scmp.ge.s32.totalorder %s21, 4
      %s31 = sphi 0, %s33
      %s34 = sphi 0, %s31
      %s35 = sphi 0, %s34
      %s51 = sphi 0, %s35
      %s57 = sphi 0, %s59
      %s60 = sphi 0, %s57
      %s61 = sphi 0, %s60
      %s77 = sphi 0, %s61
      %s81 = sphi 0, %s81
      %s83 = sphi 0, %s81
      %s84 = sphi 0, %s83
      %s98 = sphi 0, %s84
      %s102 = sphi 0, %s102
      %s104 = sphi 0, %s102
      %s105 = sphi 0, %s104
      %s119 = sphi 0, %s105
      %s123 = sphi 0, %s123
      %s125 = sphi 0, %s123
      %s126 = sphi 0, %s125
      %s140 = sphi 0, %s126
      %s146 = sphi 0, %s148
      %s149 = sphi 0, %s146
      %s150 = sphi 0, %s149
      %s166 = sphi 0, %s150
    $region4: #{tpu_custom_call.1} parent=1 // loop_header_branch
      %24 = sbr.rel (%p22) target = $region8
    $region5: #{tpu_custom_call.1} parent=1 // loop_body
      %s26 = ssub.s32 %s21, 1
      %s27 = ssub.s32 %s21, 2
      %s28 = sadd.s32 %s21, 1
      %s29 = ssub.s32 %s21, %s28
      %p30 = scmp.eq.s32.totalorder %s29, 0
      %s32 = sadd.s32 %s31, 1
      %s33 = scalar_select %p30, %s31, %s32
      %p36 = pneg %p30
      %p37 = scmp.eq.s32.totalorder %s21, 1
      %p38 = por %p36, %p37
      %p39 = scmp.ne.s32.totalorder %s31, %s34
      %p40 = scmp.eq.s32.totalorder %s21, 0
      %p41 = por %p39, %p40
      %p42 = scmp.ne.s32.totalorder %s31, %s34
      %p43 = scmp.eq.s32.totalorder %s26, 1
      %p44 = por %p42, %p43
      %p45 = scmp.ne.s32.totalorder %s34, %s35
      %p46 = scmp.eq.s32.totalorder %s26, 0
      %p47 = por %p45, %p46
      %p48 = scmp.ne.s32.totalorder %s34, %s35
      %p49 = scmp.eq.s32.totalorder %s27, 1
      %p50 = por %p48, %p49
      %p52 = scmp.ne.s32.totalorder %s35, %s51
      %p53 = scmp.eq.s32.totalorder %s27, 0
      %p54 = por %p52, %p53
      %s55 = ssub.s32 %s21, %s28
      %p56 = scmp.eq.s32.totalorder %s55, 0
      %s58 = sadd.s32 %s57, 1
      %s59 = scalar_select %p56, %s57, %s58
      %p62 = pneg %p56
      %p63 = scmp.eq.s32.totalorder %s21, 1
      %p64 = por %p62, %p63
      %p65 = scmp.ne.s32.totalorder %s57, %s60
      %p66 = scmp.eq.s32.totalorder %s21, 0
      %p67 = por %p65, %p66
      %p68 = scmp.ne.s32.totalorder %s57, %s60
      %p69 = scmp.eq.s32.totalorder %s26, 1
      %p70 = por %p68, %p69
      %p71 = scmp.ne.s32.totalorder %s60, %s61
      %p72 = scmp.eq.s32.totalorder %s26, 0
      %p73 = por %p71, %p72
      %p74 = scmp.ne.s32.totalorder %s60, %s61
      %p75 = scmp.eq.s32.totalorder %s27, 1
      %p76 = por %p74, %p75
      %p78 = scmp.ne.s32.totalorder %s61, %s77
      %p79 = scmp.eq.s32.totalorder %s27, 0
      %p80 = por %p78, %p79
      %s82 = sadd.s32 %s81, 1
      %p85 = scmp.eq.s32.totalorder %s21, 1
      %p86 = scmp.ne.s32.totalorder %s81, %s83
      %p87 = scmp.eq.s32.totalorder %s21, 0
      %p88 = por %p86, %p87
      %p89 = scmp.ne.s32.totalorder %s81, %s83
      %p90 = scmp.eq.s32.totalorder %s26, 1
      %p91 = por %p89, %p90
      %p92 = scmp.ne.s32.totalorder %s83, %s84
      %p93 = scmp.eq.s32.totalorder %s26, 0
      %p94 = por %p92, %p93
      %p95 = scmp.ne.s32.totalorder %s83, %s84
      %p96 = scmp.eq.s32.totalorder %s27, 1
      %p97 = por %p95, %p96
      %p99 = scmp.ne.s32.totalorder %s84, %s98
      %p100 = scmp.eq.s32.totalorder %s27, 0
      %p101 = por %p99, %p100
      %s103 = sadd.s32 %s102, 1
      %p106 = scmp.eq.s32.totalorder %s21, 1
      %p107 = scmp.ne.s32.totalorder %s102, %s104
      %p108 = scmp.eq.s32.totalorder %s21, 0
      %p109 = por %p107, %p108
      %p110 = scmp.ne.s32.totalorder %s102, %s104
      %p111 = scmp.eq.s32.totalorder %s26, 1
      %p112 = por %p110, %p111
      %p113 = scmp.ne.s32.totalorder %s104, %s105
      %p114 = scmp.eq.s32.totalorder %s26, 0
      %p115 = por %p113, %p114
      %p116 = scmp.ne.s32.totalorder %s104, %s105
      %p117 = scmp.eq.s32.totalorder %s27, 1
      %p118 = por %p116, %p117
      %p120 = scmp.ne.s32.totalorder %s105, %s119
      %p121 = scmp.eq.s32.totalorder %s27, 0
      %p122 = por %p120, %p121
      %s124 = sadd.s32 %s123, 1
      %p127 = scmp.eq.s32.totalorder %s21, 1
      %p128 = scmp.ne.s32.totalorder %s123, %s125
      %p129 = scmp.eq.s32.totalorder %s21, 0
      %p130 = por %p128, %p129
      %p131 = scmp.ne.s32.totalorder %s123, %s125
      %p132 = scmp.eq.s32.totalorder %s26, 1
      %p133 = por %p131, %p132
      %p134 = scmp.ne.s32.totalorder %s125, %s126
      %p135 = scmp.eq.s32.totalorder %s26, 0
      %p136 = por %p134, %p135
      %p137 = scmp.ne.s32.totalorder %s125, %s126
      %p138 = scmp.eq.s32.totalorder %s27, 1
      %p139 = por %p137, %p138
      %p141 = scmp.ne.s32.totalorder %s126, %s140
      %p142 = scmp.eq.s32.totalorder %s27, 0
      %p143 = por %p141, %p142
      %s144 = ssub.s32 %s21, %s28
      %p145 = scmp.eq.s32.totalorder %s144, 0
      %s147 = sadd.s32 %s146, 1
      %s148 = scalar_select %p145, %s146, %s147
      %p151 = pneg %p145
      %p152 = scmp.eq.s32.totalorder %s21, 1
      %p153 = por %p151, %p152
      %p154 = scmp.ne.s32.totalorder %s146, %s149
      %p155 = scmp.eq.s32.totalorder %s21, 0
      %p156 = por %p154, %p155
      %p157 = scmp.ne.s32.totalorder %s146, %s149
      %p158 = scmp.eq.s32.totalorder %s26, 1
      %p159 = por %p157, %p158
      %p160 = scmp.ne.s32.totalorder %s149, %s150
      %p161 = scmp.eq.s32.totalorder %s26, 0
      %p162 = por %p160, %p161
      %p163 = scmp.ne.s32.totalorder %s149, %s150
      %p164 = scmp.eq.s32.totalorder %s27, 1
      %p165 = por %p163, %p164
      %p167 = scmp.ne.s32.totalorder %s150, %s166
      %p168 = scmp.eq.s32.totalorder %s27, 0
      %p169 = por %p167, %p168
      %p170 = scmp.le.s32.totalorder 1, %s21
      %p171 = scmp.lt.s32.totalorder %s21, 3
      %p172 = pnand %p170, %p171
      %p173 = pneg %p172
      // Predicated region
      $region9: #{tpu_custom_call.1} parent=5 // pred_check
        _
      $region10: #{tpu_custom_call.1} parent=5 // pred_check_branch
        %175 = sbr.rel (%p172) target = $region12
      $region11: #{tpu_custom_call.1} parent=5 // pred_region
        %s176 = ssub.s32 %s21, 1
        // Predicated region
        $region13: #{tpu_custom_call.1} parent=11 // pred_check
          %p177 = pneg %p94
        $region14: #{tpu_custom_call.1} parent=11 // pred_check_branch
          %179 = sbr.rel (%p177) target = $region16
        $region15: #{tpu_custom_call.1} parent=11 // pred_region
          %s181 = ssub.s32 64, 64
          %182 = vsyncadd [#allocation6], %s181
          %s184 = sshll.u32 [#allocation7], 4
          %s185 = int_to_ptr.vmem [resolvable:$true] %s184
          %187 = dma.hbm_to_vmem [thread:$0]  %s2, 64, %s185, [#allocation6]
        $region16: #{tpu_custom_call.1} parent=11 // pred_fallthru
          _
        // Predicated region
        $region17: #{tpu_custom_call.1} parent=11 // pred_check
          %p188 = pneg %p115
        $region18: #{tpu_custom_call.1} parent=11 // pred_check_branch
          %190 = sbr.rel (%p188) target = $region20
        $region19: #{tpu_custom_call.1} parent=11 // pred_region
          %s192 = ssub.s32 16, 16
          %193 = vsyncadd [#allocation9], %s192
          %s195 = sshll.u32 [#allocation8], 4
          %s196 = int_to_ptr.vmem [resolvable:$true] %s195
          %198 = dma.hbm_to_vmem [thread:$0]  %s3, 16, %s196, [#allocation9]
        $region20: #{tpu_custom_call.1} parent=11 // pred_fallthru
          _
        // Predicated region
        $region21: #{tpu_custom_call.1} parent=11 // pred_check
          %p199 = pneg %p136
        $region22: #{tpu_custom_call.1} parent=11 // pred_check_branch
          %201 = sbr.rel (%p199) target = $region24
        $region23: #{tpu_custom_call.1} parent=11 // pred_region
          %s203 = ssub.s32 16, 16
          %204 = vsyncadd [#allocation9], %s203
          %s206 = sshll.u32 [#allocation10], 4
          %s207 = int_to_ptr.vmem [resolvable:$true] %s206
          %209 = dma.hbm_to_vmem [thread:$0]  %s4, 16, %s207, [#allocation9]
        $region24: #{tpu_custom_call.1} parent=11 // pred_fallthru
          _
      $region12: #{tpu_custom_call.1} parent=5 // pred_fallthru
        _
      %p210 = scmp.lt.s32.totalorder %s21, 2
      // Predicated region
      $region25: #{tpu_custom_call.1} parent=5 // pred_check
        %p211 = pneg %p210
      $region26: #{tpu_custom_call.1} parent=5 // pred_check_branch
        %213 = sbr.rel (%p211) target = $region28
      $region27: #{tpu_custom_call.1} parent=5 // pred_region
        // Predicated region
        $region29: #{tpu_custom_call.1} parent=27 // pred_check
          %p214 = pneg %p41
        $region30: #{tpu_custom_call.1} parent=27 // pred_check_branch
          %216 = sbr.rel (%p214) target = $region32
        $region31: #{tpu_custom_call.1} parent=27 // pred_region
          %s217 = sand.u32 %s31, 1
          %s218 = scalar_lea.sflag [#allocation3], %s217
          %s219 = sand.u32 %s31, 1
          %s220 = smul.addr %s219, 4
          %s221 = scalar_lea.vmem [#allocation2], %s220
          %s223 = ssub.s32 64, 64
          %224 = vsyncadd %s218, %s223
          %s225 = smul.addr %s21, 64
          %s226 = scalar_lea.hbm %s0, %s225
          %s228 = sshll.u32 %s221, 4
          %s229 = int_to_ptr.vmem [resolvable:$true] %s228
          %231 = dma.hbm_to_vmem [thread:$0]  %s226, 64, %s229, %s218
        $region32: #{tpu_custom_call.1} parent=27 // pred_fallthru
          _
        // Predicated region
        $region33: #{tpu_custom_call.1} parent=27 // pred_check
          %p232 = pneg %p67
        $region34: #{tpu_custom_call.1} parent=27 // pred_check_branch
          %234 = sbr.rel (%p232) target = $region36
        $region35: #{tpu_custom_call.1} parent=27 // pred_region
          %s235 = sand.u32 %s21, 1
          %s236 = scalar_lea.sflag [#allocation6], %s235
          %s237 = sand.u32 %s57, 1
          %s238 = smul.addr %s237, 4
          %s239 = scalar_lea.vmem [#allocation5], %s238
          %s241 = ssub.s32 64, 64
          %242 = vsyncadd %s236, %s241
          %s243 = smul.addr %s21, 64
          %s244 = scalar_lea.hbm %s1, %s243
          %s246 = sshll.u32 %s239, 4
          %s247 = int_to_ptr.vmem [resolvable:$true] %s246
          %249 = dma.hbm_to_vmem [thread:$0]  %s244, 64, %s247, %s236
        $region36: #{tpu_custom_call.1} parent=27 // pred_fallthru
          _
      $region28: #{tpu_custom_call.1} parent=5 // pred_fallthru
        _
      %p250 = scmp.le.s32.totalorder 1, %s21
      %p251 = scmp.lt.s32.totalorder %s21, 3
      %p252 = pnand %p250, %p251
      %p253 = pneg %p252
      // Predicated region
      $region37: #{tpu_custom_call.1} parent=5 // pred_check
        _
      $region38: #{tpu_custom_call.1} parent=5 // pred_check_branch
        %255 = sbr.rel (%p252) target = $region40
      $region39: #{tpu_custom_call.1} parent=5 // pred_region
        %s256 = ssub.s32 %s21, 1
        %s257 = sand.u32 %s34, 1
        %s258 = scalar_lea.sflag [#allocation3], %s257
        %s259 = sand.u32 %s34, 1
        %s260 = smul.addr %s259, 4
        %s261 = scalar_lea.vmem [#allocation2], %s260
        // Predicated region
        $region41: #{tpu_custom_call.1} parent=39 // pred_check
          %p262 = pneg %p47
        $region42: #{tpu_custom_call.1} parent=39 // pred_check_branch
          %264 = sbr.rel (%p262) target = $region44
        $region43: #{tpu_custom_call.1} parent=39 // pred_region
          %265 = dma.done %s258, 64
        $region44: #{tpu_custom_call.1} parent=39 // pred_fallthru
          _
        %s266 = sand.u32 %s26, 1
        %s267 = scalar_lea.sflag [#allocation6], %s266
        %s268 = sand.u32 %s60, 1
        %s269 = smul.addr %s268, 4
        %s270 = scalar_lea.vmem [#allocation5], %s269
        // Predicated region
        $region45: #{tpu_custom_call.1} parent=39 // pred_check
          %p271 = pneg %p73
        $region46: #{tpu_custom_call.1} parent=39 // pred_check_branch
          %273 = sbr.rel (%p271) target = $region48
        $region47: #{tpu_custom_call.1} parent=39 // pred_region
          %274 = dma.done %s267, 64
        $region48: #{tpu_custom_call.1} parent=39 // pred_fallthru
          _
        // Predicated region
        $region49: #{tpu_custom_call.1} parent=39 // pred_check
          %p275 = pneg %p94
        $region50: #{tpu_custom_call.1} parent=39 // pred_check_branch
          %277 = sbr.rel (%p275) target = $region52
        $region51: #{tpu_custom_call.1} parent=39 // pred_region
          %278 = dma.done [#allocation6], 64
        $region52: #{tpu_custom_call.1} parent=39 // pred_fallthru
          _
        // Predicated region
        $region53: #{tpu_custom_call.1} parent=39 // pred_check
          %p279 = pneg %p115
        $region54: #{tpu_custom_call.1} parent=39 // pred_check_branch
          %281 = sbr.rel (%p279) target = $region56
        $region55: #{tpu_custom_call.1} parent=39 // pred_region
          %282 = dma.done [#allocation9], 16
        $region56: #{tpu_custom_call.1} parent=39 // pred_fallthru
          _
        // Predicated region
        $region57: #{tpu_custom_call.1} parent=39 // pred_check
          %p283 = pneg %p136
        $region58: #{tpu_custom_call.1} parent=39 // pred_check_branch
          %285 = sbr.rel (%p283) target = $region60
        $region59: #{tpu_custom_call.1} parent=39 // pred_region
          %286 = dma.done [#allocation9], 16
        $region60: #{tpu_custom_call.1} parent=39 // pred_fallthru
          _
        %s287 = sand.u32 %s34, 1
        %s288 = scalar_lea.sflag [#allocation3], %s287
        %s289 = sand.u32 %s34, 1
        %s290 = smul.addr %s289, 4
        %s291 = scalar_lea.vmem [#allocation2], %s290
        %p292 = pneg %p47
        %p293 = pneg %p44
        %s294 = sand.u32 %s26, 1
        %s295 = scalar_lea.sflag [#allocation6], %s294
        %s296 = sand.u32 %s60, 1
        %s297 = smul.addr %s296, 4
        %s298 = scalar_lea.vmem [#allocation5], %s297
        %p299 = pneg %p73
        %p300 = pneg %p70
        %p301 = pneg %p94
        %p302 = pneg %p91
        %p303 = pneg %p115
        %p304 = pneg %p112
        %p305 = pneg %p136
        %p306 = pneg %p133
        %p307 = pneg %p162
        %p308 = pneg %p159
        %s309 = sand.u32 %s149, 1
        %s310 = scalar_lea.sflag [#allocation4], %s309
        %s311 = sand.u32 %s149, 1
        %s312 = smul.addr %s311, 4
        %s313 = scalar_lea.vmem [#allocation11], %s312
        %v314 = vld [vmem:[%s261] sm:$0xf]
        %v315 = vunpack.c.l.bf16 %v314
        %v316 = vld [vmem:[%s270] sm:$0xf]
        %v317 = vunpack.c.l.bf16 %v316
        %v318 = vadd.f32 %v315, %v317
        %v319 = vld [vmem:[#allocation7] sm:$0xf]
        %v320 = vunpack.c.l.bf16 %v319
        %v321 = vadd.f32 %v318, %v320
        %vm322 = vcmask 261120
        %v323 = vsel %vm322, %v321, 0.0
        %324 = vadd.xlane.f32.xlu0 %v323
        %v325 = vpop.xlane.xlu0 %324
        %v326 = vrcp.pop 32.0
        %v327 = vmul.f32 %v325, %v326
        %v328 = vsub.f32 %v321, %v327
        %v329 = vmul.f32 %v328, %v328
        %v330 = vsel %vm322, %v329, 0.0
        %331 = vadd.xlane.f32.xlu0 %v330
        %v332 = vpop.xlane.xlu0 %331
        %v333 = vmul.f32 %v332, %v326
        %v334 = vadd.f32 %v333, 1e-12
        %v335 = vrsqrt.pop %v334
        %v336 = vmul.f32 %v328, %v335
        %v337 = vld [vmem:[#allocation8] sm:$0x1]
        %v338 = vunpack.c.l.bf16 %v337
        %v339 = vlaneseq
        %v340 = vshrl.u32 %v339, 7
        %v341 = vsub.s32 0, %v340
        %v342 = vrot.slane %v338, %v341
        %v343 = vmul.f32 %v336, %v342
        %v344 = vld [vmem:[#allocation10] sm:$0x1]
        %v345 = vunpack.c.l.bf16 %v344
        %v346 = vlaneseq
        %v347 = vshrl.u32 %v346, 7
        %v348 = vsub.s32 0, %v347
        %v349 = vrot.slane %v345, %v348
        %v350 = vadd.f32 %v343, %v349
        %v351 = vpack.c.bf16 %v350, %v350
        %vm352 = vcmask 257024
        %353 = vst.msk [vmem:[%s313] sm:$0xf] %vm352, %v351
        %s354 = sand.u32 %s149, 1
        %s355 = scalar_lea.sflag [#allocation4], %s354
        %s356 = sand.u32 %s149, 1
        %s357 = smul.addr %s356, 4
        %s358 = scalar_lea.vmem [#allocation11], %s357
        // Predicated region
        $region61: #{tpu_custom_call.1} parent=39 // pred_check
          %p359 = pneg %p159
        $region62: #{tpu_custom_call.1} parent=39 // pred_check_branch
          %361 = sbr.rel (%p359) target = $region64
        $region63: #{tpu_custom_call.1} parent=39 // pred_region
          %s363 = ssub.s32 64, 64
          %364 = vsyncadd %s355, %s363
          %s365 = smul.addr %s26, 64
          %s366 = scalar_lea.hbm %s5, %s365
          %s368 = sshll.u32 %s358, 4
          %s369 = int_to_ptr.vmem [resolvable:$true] %s368
          %371 = dma.vmem_to_hbm [thread:$0]  %s369, 64, %s366, %s355
        $region64: #{tpu_custom_call.1} parent=39 // pred_fallthru
          _
      $region40: #{tpu_custom_call.1} parent=5 // pred_fallthru
        _
      %p372 = scmp.le.s32.totalorder 2, %s21
      // Predicated region
      $region65: #{tpu_custom_call.1} parent=5 // pred_check
        %p373 = pneg %p372
      $region66: #{tpu_custom_call.1} parent=5 // pred_check_branch
        %375 = sbr.rel (%p373) target = $region68
      $region67: #{tpu_custom_call.1} parent=5 // pred_region
        %s376 = ssub.s32 %s21, 2
        // Predicated region
        $region69: #{tpu_custom_call.1} parent=67 // pred_check
          %p377 = pneg %p165
        $region70: #{tpu_custom_call.1} parent=67 // pred_check_branch
          %379 = sbr.rel (%p377) target = $region72
        $region71: #{tpu_custom_call.1} parent=67 // pred_region
          %s380 = sand.u32 %s150, 1
          %s381 = scalar_lea.sflag [#allocation4], %s380
          %s382 = sand.u32 %s150, 1
          %s383 = smul.addr %s382, 4
          %s384 = scalar_lea.vmem [#allocation11], %s383
          %385 = dma.done %s381, 64
        $region72: #{tpu_custom_call.1} parent=67 // pred_fallthru
          _
      $region68: #{tpu_custom_call.1} parent=5 // pred_fallthru
        _
    $region6: #{tpu_custom_call.1} parent=1 // loop_footer
      %s25 = sadd.s32 1, %s21
    $region7: #{tpu_custom_call.1} parent=1 // loop_footer_branch
      %20 = sbr.rel target = $region3
    $region8: #{tpu_custom_call.1} parent=1 // loop_exit
      _
    %386 = vsyncpa [#allocation3], 1
    %s387 = scalar_lea.sflag [#allocation3], 1
    %388 = vsyncpa %s387, 1
    %389 = vsyncpa [#allocation6], 1
    %s390 = scalar_lea.sflag [#allocation6], 1
    %391 = vsyncpa %s390, 1
    %392 = vsyncpa [#allocation9], 1
    %393 = vsyncpa [#allocation4], 1
    %s394 = scalar_lea.sflag [#allocation4], 1
    %395 = vsyncpa %s394, 1

</llo_original>
